<compile_context>
chip_gen: v5e
topology: v5e:2x2
jax: 0.10.0
libtpu: 0.0.40
codegen_flags: <defaults>
</compile_context>

<pallas_src>
import jax
import jax.numpy as jnp
from jax.experimental import pallas as pl
from jax.experimental.pallas import tpu as pltpu

INF = 1e20  # parity constant; the masked path is not used by this forward


def _fast_recip(x):
    """EUP approximate reciprocal + one Newton step -> ~f32 accurate, VPU-cheap."""
    r = pl.reciprocal(x, approx=True)
    return r * (2.0 - x * r)


def attention_cols_cols_kernel(gates_ref, fields_ref, qproj_ref, theta_ref,
                               w2_ref, w3_ref, out_ref):
    tb, K, d = fields_ref.shape
    H2 = w2_ref.shape[1]
    H = H2 // 2

    cacc = gates_ref[0]                      # (tb, K)  f32
    acr = gates_ref[1]                       # (tb, K)  f32
    theta = theta_ref[...]                   # (tb, 4)  f32

    # One MXU push for both attentions.  The per-(b,k) scalar gate commutes with
    # the contraction, so the fields stream is read from HBM once, ungated.
    # (Reshape only merges leading dims; relayout-free when K % 8 == 0.)
    base = jnp.dot(fields_ref[...].reshape(tb * K, d), w2_ref[...],
                   preferred_element_type=jnp.float32).reshape(tb, K, H2)

    # Lane select: first H lanes belong to the q-attention, last H to the i one.
    lane_is_q = jax.lax.broadcasted_iota(jnp.int32, (1, 1, H2), 2) < H
    gate = 1.0 - jnp.where(lane_is_q, cacc[:, :, None], acr[:, :, None])

    # Query projections (computed once per batch row in the wrapper) are
    # broadcast over K here, in VMEM, instead of being replicated in HBM.
    pre = gate * base + qproj_ref[...][:, None, :]
    a = jnp.tanh(pre)                                          # EUP
    weighted = a * w3_ref[0:1, :][None]                        # (tb, K, 2H)

    # W3 projections as masked lane reductions (XLU; MXU/DMA stay the bottleneck).
    s_q = jnp.sum(jnp.where(lane_is_q, weighted, 0.0), axis=-1)   # (tb, K)
    s_i = jnp.sum(weighted, axis=-1) - s_q                        # (tb, K)

    def softmax_k(s):
        m = jnp.max(s, axis=-1, keepdims=True)
        e = jnp.exp(s - m)
        return e * _fast_recip(jnp.sum(e, axis=-1, keepdims=True))

    acc_q = softmax_k(s_q)
    acc_i = softmax_k(s_i)

    th1 = theta[:, 1:2]
    th2 = theta[:, 2:3]
    out_ref[0] = th1 * acc_q + th2 * acc_i          # acc_r term folded into wrapper
    out_ref[1] = jnp.clip(cacc + th1 * acc_q, 0.0, 1.0)


def _pick_batch_tile(B, cap=512):
    """Pick (tb, B_pad): tb a multiple of 8 (sublane tile), <= cap, dividing the
    padded batch; prefer a grid length >= 2 so v7x's two TensorCores both work."""
    B8 = ((B + 7) // 8) * 8
    divs = [tb for tb in range(8, min(cap, B8) + 1, 8) if B8 % tb == 0]
    multi = [tb for tb in divs if B8 // tb >= 2]
    tb = max(multi) if multi else max(divs)
    return tb, B8


def attention_cols_cols(x, h_state, db_fields_vec, db_cells_vec, cacc_q, acr,
                        carr, theta, params, r_idx=(0,),
                        mxu_dtype=jnp.bfloat16):
    """Matches AttentionColsCols.forward.  db_cells_vec / carr are unused by the
    reference forward and never reach the kernel.  MXU operand streams default to
    bf16 (f32 accumulation); pass mxu_dtype=jnp.float32 for bit-tight results."""
    del db_cells_vec, carr
    B, K, d = db_fields_vec.shape
    H = h_state.shape[-1]
    H2 = 2 * H

    (wq, w2q, w3q), (wi, w2i, w3i) = params["q"], params["i"]

    # -------------------- XLA-side layout plumbing (tiny) --------------------
    # Query projections: two (B,H)@(H,H) matmuls done once; no K-fold broadcast
    # is ever materialized in HBM.
    qproj = jnp.concatenate([h_state @ wq, x @ wi], axis=-1)            # (B, 2H) f32
    w2_cat = jnp.concatenate([w2q, w2i], axis=1).astype(mxu_dtype)      # (d, 2H)
    w3_row = jnp.concatenate([w3q, w3i], axis=0).reshape(1, H2)         # (1, 2H)
    w3_pad = jnp.broadcast_to(w3_row, (8, H2)).astype(jnp.float32)      # full sublane tile

    gates = jnp.stack([cacc_q, acr], axis=0).astype(jnp.float32)        # (2, B, K)
    fields = db_fields_vec.astype(mxu_dtype)                            # (B, K, d)
    theta_f = theta.astype(jnp.float32)                                 # (B, 4)

    tb, B_pad = _pick_batch_tile(B)
    if B_pad != B:
        padb = B_pad - B
        fields = jnp.pad(fields, ((0, padb), (0, 0), (0, 0)))
        gates = jnp.pad(gates, ((0, 0), (0, padb), (0, 0)))
        qproj = jnp.pad(qproj, ((0, padb), (0, 0)))
        theta_f = jnp.pad(theta_f, ((0, padb), (0, 0)))
    grid = (B_pad // tb,)

    item = jnp.dtype(mxu_dtype).itemsize
    flops = 2 * B_pad * K * d * H2 + 10 * B_pad * K * H2
    transcendentals = B_pad * K * H2 + 2 * B_pad * K
    bytes_accessed = (int(fields.size) * item + int(w2_cat.size) * item
                      + 4 * (int(gates.size) + int(qproj.size) + int(theta_f.size)
                             + int(w3_pad.size) + 2 * B_pad * K))

    out = pl.pallas_call(
        attention_cols_cols_kernel,
        out_shape=jax.ShapeDtypeStruct((2, B_pad, K), jnp.float32),
        grid_spec=pltpu.PrefetchScalarGridSpec(
            num_scalar_prefetch=0,
            grid=grid,
            in_specs=[
                pl.BlockSpec((2, tb, K), lambda i: (0, i, 0)),      # gates
                pl.BlockSpec((tb, K, d), lambda i: (i, 0, 0)),      # fields (bf16)
                pl.BlockSpec((tb, H2), lambda i: (i, 0)),           # query projections
                pl.BlockSpec((tb, 4), lambda i: (i, 0)),            # theta
                pl.BlockSpec((d, H2), lambda i: (0, 0)),            # [W2q | W2i] resident
                pl.BlockSpec((8, H2), lambda i: (0, 0)),            # [W3q^T | W3i^T] resident
            ],
            out_specs=pl.BlockSpec((2, tb, K), lambda i: (0, i, 0)),
        ),
        compiler_params=pltpu.CompilerParams(
            dimension_semantics=("parallel",),
            vmem_limit_bytes=32 * 1024 * 1024),
        cost_estimate=pl.CostEstimate(flops=int(flops),
                                      transcendentals=int(transcendentals),
                                      bytes_accessed=int(bytes_accessed)),
    )(gates, fields, qproj, theta_f, w2_cat, w3_pad)

    acc_kernel = out[0, :B]
    cacc_new = out[1, :B]

    # acc_r is a compile-time-constant scatter; its theta[:,0] term is a tiny
    # (B,K) FMA done here instead of an extra gate plane of kernel DMA.
    acc_r = jnp.zeros((K,), jnp.float32).at[jnp.array(list(r_idx))].set(
        1.0 / len(r_idx))
    acc = acc_kernel + acc_r[None, :] * theta[:, 0:1]
    return acc, cacc_new


# ----------------------------- reference (pure JAX) --------------------------
def _reference(x, h_state, fields, cacc_q, acr, theta, params, r_idx=(0,)):
    B, K, d = fields.shape

    def attn(q, gate, W, W2, W3):
        fv = (1.0 - gate)[:, :, None] * fields
        mem = jnp.einsum("bkd,dh->bkh", fv, W2)
        a = jnp.tanh(mem + (q @ W)[:, None, :])
        s = jnp.einsum("bkh,ho->bk", a, W3)
        return jax.nn.softmax(s, axis=-1)

    acc_r = jnp.zeros((K,)).at[jnp.array(list(r_idx))].set(1.0 / len(r_idx))
    acc_r = jnp.broadcast_to(acc_r[None, :], (B, K))
    (wq, w2q, w3q), (wi, w2i, w3i) = params["q"], params["i"]
    acc_q = attn(h_state, cacc_q, wq, w2q, w3q)
    cacc_new = jnp.clip(cacc_q + theta[:, 1:2] * acc_q, 0.0, 1.0)
    acc_i = attn(x, acr, wi, w2i, w3i)
    acc = acc_r * theta[:, 0:1] + acc_q * theta[:, 1:2] + acc_i * theta[:, 2:3]
    return acc, cacc_new


# ----------------------------- parameter init --------------------------------
def _xavier_uniform(key, shape):
    fan_in, fan_out = shape[0], shape[1]
    bound = (6.0 / (fan_in + fan_out)) ** 0.5
    return jax.random.uniform(key, shape, jnp.float32, -bound, bound)


def init_params(key, hidden_size, memory_embed_size):
    ks = jax.random.split(key, 6)
    q = (_xavier_uniform(ks[0], (hidden_size, hidden_size)),        # W
         _xavier_uniform(ks[1], (memory_embed_size, hidden_size)),  # W2
         _xavier_uniform(ks[2], (hidden_size, 1)))                  # W3
    i = (_xavier_uniform(ks[3], (hidden_size, hidden_size)),
         _xavier_uniform(ks[4], (memory_embed_size, hidden_size)),
         _xavier_uniform(ks[5], (hidden_size, 1)))
    return {"q": q, "i": i}


if __name__ == "__main__":
    B, K, H = 2, 8, 32
    d = 32  # memory_embed_size

    root = jax.random.PRNGKey(0)
    kp, kx, kh, kf, kc, kq, ka, kt = jax.random.split(root, 8)

    params = init_params(kp, H, d)

    x = jax.random.normal(kx, (B, H), jnp.float32)
    h_state = jax.random.normal(kh, (B, H), jnp.float32)
    db_fields_vec = jax.random.normal(kf, (B, K, d), jnp.float32)
    db_cells_vec = jax.random.normal(kc, (B, K, d), jnp.float32)   # unused by forward
    cacc_q = jax.random.uniform(kq, (B, K), jnp.float32)
    acr = jax.random.uniform(ka, (B, K), jnp.float32)
    carr = jnp.zeros((B, K), jnp.float32)                          # unused by forward
    theta = jax.random.uniform(kt, (B, 4), jnp.float32)

    acc_ref, cacc_ref = _reference(x, h_state, db_fields_vec, cacc_q, acr,
                                   theta, params, r_idx=(0,))

    # f32 MXU path: tight tolerance (covers fusion + approx-reciprocal error).
    acc32, cacc32 = attention_cols_cols(
        x, h_state, db_fields_vec, db_cells_vec, cacc_q, acr, carr, theta,
        params, r_idx=(0,), mxu_dtype=jnp.float32)
    jax.block_until_ready((acc32, cacc32))
    assert jnp.allclose(acc32, acc_ref, atol=5e-4, rtol=5e-4)
    assert jnp.allclose(cacc32, cacc_ref, atol=5e-4, rtol=5e-4)

    # Default bf16 MXU-operand path: looser tolerance (bf16 mantissa on the
    # fields/W2 streams; all accumulation and VPU/EUP math remain f32).
    acc_bf, cacc_bf = attention_cols_cols(
        x, h_state, db_fields_vec, db_cells_vec, cacc_q, acr, carr, theta,
        params, r_idx=(0,))
    jax.block_until_ready((acc_bf, cacc_bf))
    assert jnp.allclose(acc_bf, acc_ref, atol=2e-2, rtol=2e-2)
    assert jnp.allclose(cacc_bf, cacc_ref, atol=2e-2, rtol=2e-2)

    print("KERNEL_OK")
</pallas_src>

<mosaic_0001>
module attributes {stable_mosaic.version = 11 : i64} {
  func.func @attention_cols_cols_kernel(%arg0: i32, %arg1: memref<2x8x8xf32, #tpu.memory_space<vmem>>, %arg2: memref<8x8x32xf32, #tpu.memory_space<vmem>>, %arg3: memref<8x64xf32, #tpu.memory_space<vmem>>, %arg4: memref<8x4xf32, #tpu.memory_space<vmem>>, %arg5: memref<32x64xf32, #tpu.memory_space<vmem>>, %arg6: memref<8x64xf32, #tpu.memory_space<vmem>>, %arg7: memref<2x8x8xf32, #tpu.memory_space<vmem>>) attributes {dimension_semantics = [#tpu.dimension_semantics<parallel>], iteration_bounds = array<i64: 1>, scalar_prefetch = 0 : i64, scratch_operands = 0 : i64, tpu.core_type = #tpu.core_type<tc>, window_params = [{transform_indices = @transform_0, window_bounds = array<i64: 2, 8, 8>}, {transform_indices = @transform_1, window_bounds = array<i64: 8, 8, 32>}, {transform_indices = @transform_2, window_bounds = array<i64: 8, 64>}, {transform_indices = @transform_3, window_bounds = array<i64: 8, 4>}, {pipeline_mode = #tpu.pipeline_mode<synchronous>, transform_indices = @transform_4, window_bounds = array<i64: 32, 64>}, {pipeline_mode = #tpu.pipeline_mode<synchronous>, transform_indices = @transform_5, window_bounds = array<i64: 8, 64>}, {transform_indices = @transform_6, window_bounds = array<i64: 2, 8, 8>}]} {
    %c0 = arith.constant 0 : index
    %c0_0 = arith.constant 0 : index
    %c0_1 = arith.constant 0 : index
    %0 = vector.load %arg1[%c0, %c0_0, %c0_1] : memref<2x8x8xf32, #tpu.memory_space<vmem>>, vector<1x8x8xf32>
    %1 = vector.shape_cast %0 : vector<1x8x8xf32> to vector<8x8xf32>
    %c1 = arith.constant 1 : index
    %c0_2 = arith.constant 0 : index
    %c0_3 = arith.constant 0 : index
    %2 = vector.load %arg1[%c1, %c0_2, %c0_3] : memref<2x8x8xf32, #tpu.memory_space<vmem>>, vector<1x8x8xf32>
    %3 = vector.shape_cast %2 : vector<1x8x8xf32> to vector<8x8xf32>
    %c0_4 = arith.constant 0 : index
    %c0_5 = arith.constant 0 : index
    %4 = vector.load %arg4[%c0_4, %c0_5] : memref<8x4xf32, #tpu.memory_space<vmem>>, vector<8x4xf32>
    %c0_6 = arith.constant 0 : index
    %c0_7 = arith.constant 0 : index
    %c0_8 = arith.constant 0 : index
    %5 = vector.load %arg2[%c0_6, %c0_7, %c0_8] : memref<8x8x32xf32, #tpu.memory_space<vmem>>, vector<8x8x32xf32>
    %6 = vector.shape_cast %5 : vector<8x8x32xf32> to vector<64x32xf32>
    %c0_9 = arith.constant 0 : index
    %c0_10 = arith.constant 0 : index
    %7 = vector.load %arg5[%c0_9, %c0_10] : memref<32x64xf32, #tpu.memory_space<vmem>>, vector<32x64xf32>
    %cst = arith.constant dense<0.000000e+00> : vector<64x64xf32>
    %8 = tpu.matmul %6, %7, %cst {dimension_numbers = #tpu.dot_dimension_numbers<[1], [0], [0], [1], [0, 0, 1, 1], [], []>} : vector<64x32xf32>, vector<32x64xf32>, vector<64x64xf32> -> vector<64x64xf32>
    %9 = vector.shape_cast %8 : vector<64x64xf32> to vector<8x8x64xf32>
    %10 = tpu.iota {dimensions = array<i32: 2>} : vector<1x1x64xi32>
    %c32_i32 = arith.constant 32 : i32
    %11 = vector.broadcast %c32_i32 : i32 to vector<1x1x64xi32>
    %12 = arith.cmpi slt, %10, %11 : vector<1x1x64xi32>
    %13 = vector.shape_cast %1 : vector<8x8xf32> to vector<8x8x1xf32>
    %14 = vector.shape_cast %3 : vector<8x8xf32> to vector<8x8x1xf32>
    %15 = vector.shape_cast %12 : vector<1x1x64xi1> to vector<1x1x64xi1>
    %16 = vector.broadcast %15 : vector<1x1x64xi1> to vector<8x8x64xi1>
    %17 = vector.shape_cast %13 : vector<8x8x1xf32> to vector<8x8x1xf32>
    %18 = vector.broadcast %17 : vector<8x8x1xf32> to vector<8x8x64xf32>
    %19 = vector.shape_cast %14 : vector<8x8x1xf32> to vector<8x8x1xf32>
    %20 = vector.broadcast %19 : vector<8x8x1xf32> to vector<8x8x64xf32>
    %21 = arith.select %16, %18, %20 : vector<8x8x64xi1>, vector<8x8x64xf32>
    %cst_11 = arith.constant 1.000000e+00 : f32
    %22 = vector.broadcast %cst_11 : f32 to vector<8x8x64xf32>
    %23 = arith.subf %22, %21 : vector<8x8x64xf32>
    %24 = arith.mulf %23, %9 : vector<8x8x64xf32>
    %c0_12 = arith.constant 0 : index
    %c0_13 = arith.constant 0 : index
    %25 = vector.load %arg3[%c0_12, %c0_13] : memref<8x64xf32, #tpu.memory_space<vmem>>, vector<8x64xf32>
    %26 = vector.shape_cast %25 : vector<8x64xf32> to vector<8x1x64xf32>
    %27 = vector.broadcast %26 : vector<8x1x64xf32> to vector<8x8x64xf32>
    %28 = arith.addf %24, %27 : vector<8x8x64xf32>
    %29 = math.tanh %28 : vector<8x8x64xf32>
    %c0_14 = arith.constant 0 : index
    %c0_15 = arith.constant 0 : index
    %30 = vector.load %arg6[%c0_14, %c0_15] : memref<8x64xf32, #tpu.memory_space<vmem>>, vector<1x64xf32>
    %31 = vector.shape_cast %30 : vector<1x64xf32> to vector<1x1x64xf32>
    %32 = vector.broadcast %31 : vector<1x1x64xf32> to vector<8x8x64xf32>
    %33 = arith.mulf %29, %32 : vector<8x8x64xf32>
    %cst_16 = arith.constant 0.000000e+00 : f32
    %34 = vector.shape_cast %12 : vector<1x1x64xi1> to vector<1x1x64xi1>
    %35 = vector.broadcast %34 : vector<1x1x64xi1> to vector<8x8x64xi1>
    %36 = vector.broadcast %cst_16 : f32 to vector<8x8x64xf32>
    %37 = arith.select %35, %33, %36 : vector<8x8x64xi1>, vector<8x8x64xf32>
    %cst_17 = arith.constant dense<0.000000e+00> : vector<8x8xf32>
    %38 = vector.multi_reduction <add>, %37, %cst_17 [2] : vector<8x8x64xf32> to vector<8x8xf32>
    %cst_18 = arith.constant dense<0.000000e+00> : vector<8x8xf32>
    %39 = vector.multi_reduction <add>, %33, %cst_18 [2] : vector<8x8x64xf32> to vector<8x8xf32>
    %40 = arith.subf %39, %38 : vector<8x8xf32>
    %cst_19 = arith.constant dense<0xFF800000> : vector<8xf32>
    %41 = vector.multi_reduction <maximumf>, %38, %cst_19 [1] : vector<8x8xf32> to vector<8xf32>
    %42 = vector.shape_cast %41 : vector<8xf32> to vector<8x1xf32>
    %43 = vector.broadcast %42 : vector<8x1xf32> to vector<8x8xf32>
    %44 = arith.subf %38, %43 : vector<8x8xf32>
    %45 = math.exp %44 : vector<8x8xf32>
    %cst_20 = arith.constant dense<0.000000e+00> : vector<8xf32>
    %46 = vector.multi_reduction <add>, %45, %cst_20 [1] : vector<8x8xf32> to vector<8xf32>
    %47 = vector.shape_cast %46 : vector<8xf32> to vector<8x1xf32>
    %48 = tpu.reciprocal %47 {approx = true} : vector<8x1xf32> -> vector<8x1xf32>
    %49 = arith.mulf %47, %48 : vector<8x1xf32>
    %cst_21 = arith.constant 2.000000e+00 : f32
    %50 = vector.broadcast %cst_21 : f32 to vector<8x1xf32>
    %51 = arith.subf %50, %49 : vector<8x1xf32>
    %52 = arith.mulf %48, %51 : vector<8x1xf32>
    %53 = vector.broadcast %52 : vector<8x1xf32> to vector<8x8xf32>
    %54 = arith.mulf %45, %53 : vector<8x8xf32>
    %cst_22 = arith.constant dense<0xFF800000> : vector<8xf32>
    %55 = vector.multi_reduction <maximumf>, %40, %cst_22 [1] : vector<8x8xf32> to vector<8xf32>
    %56 = vector.shape_cast %55 : vector<8xf32> to vector<8x1xf32>
    %57 = vector.broadcast %56 : vector<8x1xf32> to vector<8x8xf32>
    %58 = arith.subf %40, %57 : vector<8x8xf32>
    %59 = math.exp %58 : vector<8x8xf32>
    %cst_23 = arith.constant dense<0.000000e+00> : vector<8xf32>
    %60 = vector.multi_reduction <add>, %59, %cst_23 [1] : vector<8x8xf32> to vector<8xf32>
    %61 = vector.shape_cast %60 : vector<8xf32> to vector<8x1xf32>
    %62 = tpu.reciprocal %61 {approx = true} : vector<8x1xf32> -> vector<8x1xf32>
    %63 = arith.mulf %61, %62 : vector<8x1xf32>
    %cst_24 = arith.constant 2.000000e+00 : f32
    %64 = vector.broadcast %cst_24 : f32 to vector<8x1xf32>
    %65 = arith.subf %64, %63 : vector<8x1xf32>
    %66 = arith.mulf %62, %65 : vector<8x1xf32>
    %67 = vector.broadcast %66 : vector<8x1xf32> to vector<8x8xf32>
    %68 = arith.mulf %59, %67 : vector<8x8xf32>
    %69 = vector.extract_strided_slice %4 {offsets = [0, 1], sizes = [8, 1], strides = [1, 1]} : vector<8x4xf32> to vector<8x1xf32>
    %70 = vector.extract_strided_slice %4 {offsets = [0, 2], sizes = [8, 1], strides = [1, 1]} : vector<8x4xf32> to vector<8x1xf32>
    %71 = vector.broadcast %69 : vector<8x1xf32> to vector<8x8xf32>
    %72 = arith.mulf %71, %54 : vector<8x8xf32>
    %73 = vector.broadcast %70 : vector<8x1xf32> to vector<8x8xf32>
    %74 = arith.mulf %73, %68 : vector<8x8xf32>
    %75 = arith.addf %72, %74 : vector<8x8xf32>
    %c0_25 = arith.constant 0 : index
    %c0_26 = arith.constant 0 : index
    %c0_27 = arith.constant 0 : index
    %76 = vector.load %arg7[%c0_25, %c0_26, %c0_27] : memref<2x8x8xf32, #tpu.memory_space<vmem>>, vector<1x8x8xf32>
    %77 = vector.shape_cast %76 : vector<1x8x8xf32> to vector<8x8xf32>
    %78 = vector.shape_cast %75 : vector<8x8xf32> to vector<1x8x8xf32>
    tpu.vector_store %arg7[%c0_25, %c0_26, %c0_27], %78 {strides = array<i32>} : memref<2x8x8xf32, #tpu.memory_space<vmem>>, vector<1x8x8xf32>,
    %79 = vector.broadcast %69 : vector<8x1xf32> to vector<8x8xf32>
    %80 = arith.mulf %79, %54 : vector<8x8xf32>
    %81 = arith.addf %1, %80 : vector<8x8xf32>
    %cst_28 = arith.constant 0.000000e+00 : f32
    %cst_29 = arith.constant 1.000000e+00 : f32
    %82 = vector.broadcast %cst_28 : f32 to vector<8x8xf32>
    %83 = arith.maximumf %82, %81 : vector<8x8xf32>
    %84 = vector.broadcast %cst_29 : f32 to vector<8x8xf32>
    %85 = arith.minimumf %84, %83 : vector<8x8xf32>
    %c1_30 = arith.constant 1 : index
    %c0_31 = arith.constant 0 : index
    %c0_32 = arith.constant 0 : index
    %86 = vector.load %arg7[%c1_30, %c0_31, %c0_32] : memref<2x8x8xf32, #tpu.memory_space<vmem>>, vector<1x8x8xf32>
    %87 = vector.shape_cast %86 : vector<1x8x8xf32> to vector<8x8xf32>
    %88 = vector.shape_cast %85 : vector<8x8xf32> to vector<1x8x8xf32>
    tpu.vector_store %arg7[%c1_30, %c0_31, %c0_32], %88 {strides = array<i32>} : memref<2x8x8xf32, #tpu.memory_space<vmem>>, vector<1x8x8xf32>,
    return
  }
  func.func @transform_0(%arg0: i32) -> (i32, i32, i32) {
    %c0_i32 = arith.constant 0 : i32
    %c0_i32_0 = arith.constant 0 : i32
    %c0_i32_1 = arith.constant 0 : i32
    return %c0_i32, %arg0, %c0_i32_0 : i32, i32, i32
  }
  func.func @transform_1(%arg0: i32) -> (i32, i32, i32) {
    %c0_i32 = arith.constant 0 : i32
    %c0_i32_0 = arith.constant 0 : i32
    %c0_i32_1 = arith.constant 0 : i32
    return %arg0, %c0_i32, %c0_i32_0 : i32, i32, i32
  }
  func.func @transform_2(%arg0: i32) -> (i32, i32) {
    %c0_i32 = arith.constant 0 : i32
    %c0_i32_0 = arith.constant 0 : i32
    return %arg0, %c0_i32 : i32, i32
  }
  func.func @transform_3(%arg0: i32) -> (i32, i32) {
    %c0_i32 = arith.constant 0 : i32
    %c0_i32_0 = arith.constant 0 : i32
    return %arg0, %c0_i32 : i32, i32
  }
  func.func @transform_4(%arg0: i32) -> (i32, i32) {
    %c0_i32 = arith.constant 0 : i32
    %c0_i32_0 = arith.constant 0 : i32
    %c0_i32_1 = arith.constant 0 : i32
    return %c0_i32, %c0_i32_0 : i32, i32
  }
  func.func @transform_5(%arg0: i32) -> (i32, i32) {
    %c0_i32 = arith.constant 0 : i32
    %c0_i32_0 = arith.constant 0 : i32
    %c0_i32_1 = arith.constant 0 : i32
    return %c0_i32, %c0_i32_0 : i32, i32
  }
  func.func @transform_6(%arg0: i32) -> (i32, i32, i32) {
    %c0_i32 = arith.constant 0 : i32
    %c0_i32_0 = arith.constant 0 : i32
    %c0_i32_1 = arith.constant 0 : i32
    return %c0_i32, %arg0, %c0_i32_0 : i32, i32, i32
  }
}

</mosaic_0001>

<llo_original>
// kernel: tpu_custom_call.1
$region0: #{tpu_custom_call.1}
  #allocation0 [shape = 'u32[]', space=smem, size = 0x4, offset = 0x4, fixed_abs, tag = 'smem constant byte address 0x4 - core index']
  #allocation1 [shape = 'u32[72,128]{1,0:T(1,128)}', space=vmem, size = 0x9000, scoped, tag = 'internal scratch']
  %s0 = inlined_call_operand.hbm [shape: f32[2,8,8], index: 0, kind: input, shape index: {}]
  %s1 = inlined_call_operand.hbm [shape: f32[8,8,32], index: 1, kind: input, shape index: {}]
  %s2 = inlined_call_operand.vmem [shape: f32[8,64], index: 2, kind: input, shape index: {}]
  %s3 = inlined_call_operand.vmem [shape: f32[8,4], index: 3, kind: input, shape index: {}]
  %s4 = inlined_call_operand.hbm [shape: f32[32,64], index: 4, kind: input, shape index: {}]
  %s5 = inlined_call_operand.vmem [shape: f32[8,64], index: 5, kind: input, shape index: {}]
  %s6 = inlined_call_operand.hbm [shape: f32[2,8,8], index: 6, kind: output, shape index: {}]
  %s7 = sld [smem:[#allocation0]]
  $region46: #{tpu_custom_call.1} parent=0
    _
  %s9 = ssub.s32 1, %s7
  %s10 = scalar_select 0, %s9, %s7
  $region1: #{tpu_custom_call.1} parent=0
    #allocation2 [shape = 'u8[8192]{0}', space=vmem, size = 0x2000, scoped, tag = 'input window, operand 0, single buffered']
    #allocation3 [shape = 's32[1]{0}', space=sflag, size = 0x4, scoped, tag = 'scoped memory for tpu_custom_call.1']
    #allocation4 [shape = 's32[1]{0}', space=sflag, size = 0x4, scoped, tag = 'scoped memory for tpu_custom_call.1']
    #allocation5 [shape = 'u8[32768]{0}', space=vmem, size = 0x8000, scoped, tag = 'input window, operand 1, single buffered']
    #allocation6 [shape = 's32[1]{0}', space=sflag, size = 0x4, scoped, tag = 'scoped memory for tpu_custom_call.1']
    #allocation7 [shape = 'u8[16384]{0}', space=vmem, size = 0x4000, scoped, tag = 'input window, operand 4, single buffered']
    #allocation8 [shape = 'u8[8192]{0}', space=vmem, size = 0x2000, scoped, tag = 'output window, operand 0, single buffered']
    %11 = vsyncpa [#allocation3], 0
    %12 = vsyncpa [#allocation6], 0
    %13 = vsyncpa [#allocation4], 0
    // Predicated region
    $region2: #{tpu_custom_call.1} parent=1 // pred_check
      _
    $region3: #{tpu_custom_call.1} parent=1 // pred_check_branch
      %15 = sbr.rel (0) target = $region5
    $region4: #{tpu_custom_call.1} parent=1 // pred_region
      %17 = vsyncadd [#allocation3], 0
      %s18 = sshll.u32 %s0, 4
      %s19 = int_to_ptr.hbm [resolvable:$true] %s18
      %s20 = sshll.u32 [#allocation2], 4
      %s21 = int_to_ptr.vmem [resolvable:$true] %s20
      %26 = dma.hbm_to_vmem [thread:$0]  %s19, 256, %s21, [#allocation3], 128, 128, 8
    $region5: #{tpu_custom_call.1} parent=1 // pred_fallthru
      _
    // Predicated region
    $region6: #{tpu_custom_call.1} parent=1 // pred_check
      _
    $region7: #{tpu_custom_call.1} parent=1 // pred_check_branch
      %28 = sbr.rel (0) target = $region9
    $region8: #{tpu_custom_call.1} parent=1 // pred_region
      %30 = vsyncadd [#allocation6], 0
      %s31 = sshll.u32 %s1, 4
      %s32 = int_to_ptr.hbm [resolvable:$true] %s31
      %s33 = sshll.u32 [#allocation5], 4
      %s34 = int_to_ptr.vmem [resolvable:$true] %s33
      %39 = dma.hbm_to_vmem [thread:$0]  %s32, 1024, %s34, [#allocation6], 128, 128, 8
    $region9: #{tpu_custom_call.1} parent=1 // pred_fallthru
      _
    // Predicated region
    $region10: #{tpu_custom_call.1} parent=1 // pred_check
      _
    $region11: #{tpu_custom_call.1} parent=1 // pred_check_branch
      %41 = sbr.rel (0) target = $region13
    $region12: #{tpu_custom_call.1} parent=1 // pred_region
      _
    $region13: #{tpu_custom_call.1} parent=1 // pred_fallthru
      _
    // Predicated region
    $region14: #{tpu_custom_call.1} parent=1 // pred_check
      _
    $region15: #{tpu_custom_call.1} parent=1 // pred_check_branch
      %43 = sbr.rel (0) target = $region17
    $region16: #{tpu_custom_call.1} parent=1 // pred_region
      _
    $region17: #{tpu_custom_call.1} parent=1 // pred_fallthru
      _
    // Predicated region
    $region18: #{tpu_custom_call.1} parent=1 // pred_check
      _
    $region19: #{tpu_custom_call.1} parent=1 // pred_check_branch
      %45 = sbr.rel (0) target = $region21
    $region20: #{tpu_custom_call.1} parent=1 // pred_region
      %47 = vsyncadd [#allocation6], 0
      %s48 = sshll.u32 %s4, 4
      %s49 = int_to_ptr.hbm [resolvable:$true] %s48
      %s50 = sshll.u32 [#allocation7], 4
      %s51 = int_to_ptr.vmem [resolvable:$true] %s50
      %56 = dma.hbm_to_vmem [thread:$0]  %s49, 512, %s51, [#allocation6], 128, 128, 8
    $region21: #{tpu_custom_call.1} parent=1 // pred_fallthru
      _
    // Predicated region
    $region22: #{tpu_custom_call.1} parent=1 // pred_check
      _
    $region23: #{tpu_custom_call.1} parent=1 // pred_check_branch
      %58 = sbr.rel (0) target = $region25
    $region24: #{tpu_custom_call.1} parent=1 // pred_region
      _
    $region25: #{tpu_custom_call.1} parent=1 // pred_fallthru
      _
    // Predicated region
    $region26: #{tpu_custom_call.1} parent=1 // pred_check
      _
    $region27: #{tpu_custom_call.1} parent=1 // pred_check_branch
      %60 = sbr.rel (0) target = $region29
    $region28: #{tpu_custom_call.1} parent=1 // pred_region
      %62 = dma.done [#allocation3], 256
    $region29: #{tpu_custom_call.1} parent=1 // pred_fallthru
      _
    // Predicated region
    $region30: #{tpu_custom_call.1} parent=1 // pred_check
      _
    $region31: #{tpu_custom_call.1} parent=1 // pred_check_branch
      %64 = sbr.rel (0) target = $region33
    $region32: #{tpu_custom_call.1} parent=1 // pred_region
      %66 = dma.done [#allocation6], 1024
    $region33: #{tpu_custom_call.1} parent=1 // pred_fallthru
      _
    // Predicated region
    $region34: #{tpu_custom_call.1} parent=1 // pred_check
      _
    $region35: #{tpu_custom_call.1} parent=1 // pred_check_branch
      %68 = sbr.rel (0) target = $region37
    $region36: #{tpu_custom_call.1} parent=1 // pred_region
      %70 = dma.done [#allocation6], 512
    $region37: #{tpu_custom_call.1} parent=1 // pred_fallthru
      _
    %v71 = vld [vmem:[#allocation2] sm:$0xff]
    %s72 = scalar_lea.vmem [#allocation2], 8
    %v73 = vld [vmem:[%s72] sm:$0xff]
    %v74 = vld [vmem:[%s3] sm:$0xff]
    %v75 = vld [vmem:[#allocation5] sm:$0xff]
    %v76 = vld [vmem:[#allocation5 + $0x8] sm:$0xff]
    %v77 = vld [vmem:[#allocation5 + $0x10] sm:$0xff]
    %v78 = vld [vmem:[#allocation5 + $0x18] sm:$0xff]
    %v79 = vld [vmem:[#allocation5 + $0x20] sm:$0xff]
    %v80 = vld [vmem:[#allocation5 + $0x28] sm:$0xff]
    %v81 = vld [vmem:[#allocation5 + $0x30] sm:$0xff]
    %v82 = vld [vmem:[#allocation5 + $0x38] sm:$0xff]
    %v83 = vld [vmem:[#allocation7] sm:$0xff]
    %v84 = vld [vmem:[#allocation7 + $0x8] sm:$0xff]
    %v85 = vld [vmem:[#allocation7 + $0x10] sm:$0xff]
    %v86 = vld [vmem:[#allocation7 + $0x18] sm:$0xff]
    %vm87 = vcmask 261120
    %v89 = vsel %vm87, %v75, 0
    %v92 = vsel %vm87, %v76, 0
    %v95 = vsel %vm87, %v77, 0
    %v98 = vsel %vm87, %v78, 0
    %v101 = vsel %vm87, %v79, 0
    %v104 = vsel %vm87, %v80, 0
    %v107 = vsel %vm87, %v81, 0
    %v110 = vsel %vm87, %v82, 0
    %112 = vmatpush.msra.mxu0 0.0
    %113 = vmatpush.msra.mxu0 0.0
    %114 = vmatpush.msra.mxu0 0.0
    %115 = vmatpush.msra.mxu0 0.0
    %116 = vmatpush.msra.mxu0 0.0
    %117 = vmatpush.msra.mxu0 0.0
    %118 = vmatpush.msra.mxu0 0.0
    %119 = vmatpush.msra.mxu0 0.0
    %120 = vmatpush.msra.mxu0 0.0
    %121 = vmatpush.msra.mxu0 0.0
    %122 = vmatpush.msra.mxu0 0.0
    %123 = vmatpush.msra.mxu0 0.0
    %124 = vmatpush.msra.mxu0 %v86
    %125 = vmatpush.msra.mxu0 %v85
    %126 = vmatpush.msra.mxu0 %v84
    %127 = vmatpush.msra.mxu0 %v83
    %128 = vmatmul.f32.gmra.mxu0 %v89
    %v129 = vpop.f32.mrf.mxu0
    %v130 = vadd.f32 0.0, %v129
    %131 = vmatmul.f32.gmra.mxu0 %v92
    %v132 = vpop.f32.mrf.mxu0
    %v133 = vadd.f32 0.0, %v132
    %134 = vmatmul.f32.gmra.mxu0 %v95
    %v135 = vpop.f32.mrf.mxu0
    %v136 = vadd.f32 0.0, %v135
    %137 = vmatmul.f32.gmra.mxu0 %v98
    %v138 = vpop.f32.mrf.mxu0
    %v139 = vadd.f32 0.0, %v138
    %140 = vmatmul.f32.gmra.mxu0 %v101
    %v141 = vpop.f32.mrf.mxu0
    %v142 = vadd.f32 0.0, %v141
    %143 = vmatmul.f32.gmra.mxu0 %v104
    %v144 = vpop.f32.mrf.mxu0
    %v145 = vadd.f32 0.0, %v144
    %146 = vmatmul.f32.gmra.mxu0 %v107
    %v147 = vpop.f32.mrf.mxu0
    %v148 = vadd.f32 0.0, %v147
    %149 = vmatmul.f32.gmra.mxu0 %v110
    %v150 = vpop.f32.mrf.mxu0
    %v151 = vadd.f32 0.0, %v150
    %152 = vdwg.mxu0
    %v153 = vlaneseq
    %v154 = vand.u32 %v153, 127
    %vm155 = vcmp.lt.s32.totalorder %v154, 32
    %v156 = vperm.slane %v71, 0
    %v157 = vlaneseq
    %v158 = vshrl.u32 %v157, 7
    %160 = vset.pattern.permute.xlu0 %v158
    %161 = vperm.xlu0 %160, %v156
    %v162 = vpop.permute.xlu0 %161
    %v163 = vperm.slane %v71, 1
    %v164 = vlaneseq
    %v165 = vshrl.u32 %v164, 7
    %167 = vset.pattern.permute.xlu0 %v165
    %168 = vperm.xlu0 %167, %v163
    %v169 = vpop.permute.xlu0 %168
    %v170 = vperm.slane %v71, 2
    %v171 = vlaneseq
    %v172 = vshrl.u32 %v171, 7
    %174 = vset.pattern.permute.xlu0 %v172
    %175 = vperm.xlu0 %174, %v170
    %v176 = vpop.permute.xlu0 %175
    %v177 = vperm.slane %v71, 3
    %v178 = vlaneseq
    %v179 = vshrl.u32 %v178, 7
    %181 = vset.pattern.permute.xlu0 %v179
    %182 = vperm.xlu0 %181, %v177
    %v183 = vpop.permute.xlu0 %182
    %v184 = vperm.slane %v71, 4
    %v185 = vlaneseq
    %v186 = vshrl.u32 %v185, 7
    %188 = vset.pattern.permute.xlu0 %v186
    %189 = vperm.xlu0 %188, %v184
    %v190 = vpop.permute.xlu0 %189
    %v191 = vperm.slane %v71, 5
    %v192 = vlaneseq
    %v193 = vshrl.u32 %v192, 7
    %195 = vset.pattern.permute.xlu0 %v193
    %196 = vperm.xlu0 %195, %v191
    %v197 = vpop.permute.xlu0 %196
    %v198 = vperm.slane %v71, 6
    %v199 = vlaneseq
    %v200 = vshrl.u32 %v199, 7
    %202 = vset.pattern.permute.xlu0 %v200
    %203 = vperm.xlu0 %202, %v198
    %v204 = vpop.permute.xlu0 %203
    %v205 = vperm.slane %v71, 7
    %v206 = vlaneseq
    %v207 = vshrl.u32 %v206, 7
    %209 = vset.pattern.permute.xlu0 %v207
    %210 = vperm.xlu0 %209, %v205
    %v211 = vpop.permute.xlu0 %210
    %v212 = vperm.slane %v73, 0
    %v213 = vlaneseq
    %v214 = vshrl.u32 %v213, 7
    %216 = vset.pattern.permute.xlu0 %v214
    %217 = vperm.xlu0 %216, %v212
    %v218 = vpop.permute.xlu0 %217
    %v219 = vperm.slane %v73, 1
    %v220 = vlaneseq
    %v221 = vshrl.u32 %v220, 7
    %223 = vset.pattern.permute.xlu0 %v221
    %224 = vperm.xlu0 %223, %v219
    %v225 = vpop.permute.xlu0 %224
    %v226 = vperm.slane %v73, 2
    %v227 = vlaneseq
    %v228 = vshrl.u32 %v227, 7
    %230 = vset.pattern.permute.xlu0 %v228
    %231 = vperm.xlu0 %230, %v226
    %v232 = vpop.permute.xlu0 %231
    %v233 = vperm.slane %v73, 3
    %v234 = vlaneseq
    %v235 = vshrl.u32 %v234, 7
    %237 = vset.pattern.permute.xlu0 %v235
    %238 = vperm.xlu0 %237, %v233
    %v239 = vpop.permute.xlu0 %238
    %v240 = vperm.slane %v73, 4
    %v241 = vlaneseq
    %v242 = vshrl.u32 %v241, 7
    %244 = vset.pattern.permute.xlu0 %v242
    %245 = vperm.xlu0 %244, %v240
    %v246 = vpop.permute.xlu0 %245
    %v247 = vperm.slane %v73, 5
    %v248 = vlaneseq
    %v249 = vshrl.u32 %v248, 7
    %251 = vset.pattern.permute.xlu0 %v249
    %252 = vperm.xlu0 %251, %v247
    %v253 = vpop.permute.xlu0 %252
    %v254 = vperm.slane %v73, 6
    %v255 = vlaneseq
    %v256 = vshrl.u32 %v255, 7
    %258 = vset.pattern.permute.xlu0 %v256
    %259 = vperm.xlu0 %258, %v254
    %v260 = vpop.permute.xlu0 %259
    %v261 = vperm.slane %v73, 7
    %v262 = vlaneseq
    %v263 = vshrl.u32 %v262, 7
    %265 = vset.pattern.permute.xlu0 %v263
    %266 = vperm.xlu0 %265, %v261
    %v267 = vpop.permute.xlu0 %266
    %v268 = vsel %vm155, 1, 0
    %vm269 = vcmp.eq.s32.totalorder %v268, 1
    %v270 = vsel %vm269, %v162, %v218
    %v271 = vsel %vm269, %v169, %v225
    %v272 = vsel %vm269, %v176, %v232
    %v273 = vsel %vm269, %v183, %v239
    %v274 = vsel %vm269, %v190, %v246
    %v275 = vsel %vm269, %v197, %v253
    %v276 = vsel %vm269, %v204, %v260
    %v277 = vsel %vm269, %v211, %v267
    %v278 = vsub.f32 1.0, %v270
    %v279 = vsub.f32 1.0, %v271
    %v280 = vsub.f32 1.0, %v272
    %v281 = vsub.f32 1.0, %v273
    %v282 = vsub.f32 1.0, %v274
    %v283 = vsub.f32 1.0, %v275
    %v284 = vsub.f32 1.0, %v276
    %v285 = vsub.f32 1.0, %v277
    %v286 = vmul.f32 %v278, %v130
    %v287 = vmul.f32 %v279, %v133
    %v288 = vmul.f32 %v280, %v136
    %v289 = vmul.f32 %v281, %v139
    %v290 = vmul.f32 %v282, %v142
    %v291 = vmul.f32 %v283, %v145
    %v292 = vmul.f32 %v284, %v148
    %v293 = vmul.f32 %v285, %v151
    %v294 = vld [vmem:[%s2] sm:$0xff]
    %v296 = vrot.slane %v294, 1
    %v297 = vrot.slane %v294, 2
    %v298 = vrot.slane %v294, 3
    %v299 = vrot.slane %v294, 4
    %v300 = vrot.slane %v294, 5
    %v301 = vrot.slane %v294, 6
    %v302 = vrot.slane %v294, 7
    %v303 = vperm.slane %v294, 0
    %v304 = vperm.slane %v296, 0
    %v305 = vperm.slane %v297, 0
    %v306 = vperm.slane %v298, 0
    %v307 = vperm.slane %v299, 0
    %v308 = vperm.slane %v300, 0
    %v309 = vperm.slane %v301, 0
    %v310 = vperm.slane %v302, 0
    %v319 = vadd.f32 %v286, %v303
    %v320 = vadd.f32 %v287, %v304
    %v321 = vadd.f32 %v288, %v305
    %v322 = vadd.f32 %v289, %v306
    %v323 = vadd.f32 %v290, %v307
    %v324 = vadd.f32 %v291, %v308
    %v325 = vadd.f32 %v292, %v309
    %v326 = vadd.f32 %v293, %v310
    %v327 = vtanh.pop %v319
    %v328 = vtanh.pop %v320
    %v329 = vtanh.pop %v321
    %v330 = vtanh.pop %v322
    %v331 = vtanh.pop %v323
    %v332 = vtanh.pop %v324
    %v333 = vtanh.pop %v325
    %v334 = vtanh.pop %v326
    %v335 = vld [vmem:[%s5] sm:$0x1]
    %v336 = vperm.slane %v335, 0
    %v337 = vmul.f32 %v327, %v336
    %v338 = vmul.f32 %v328, %v336
    %v339 = vmul.f32 %v329, %v336
    %v340 = vmul.f32 %v330, %v336
    %v341 = vmul.f32 %v331, %v336
    %v342 = vmul.f32 %v332, %v336
    %v343 = vmul.f32 %v333, %v336
    %v344 = vmul.f32 %v334, %v336
    %v345 = vsel %vm269, %v337, 0.0
    %v346 = vsel %vm269, %v338, 0.0
    %v347 = vsel %vm269, %v339, 0.0
    %v348 = vsel %vm269, %v340, 0.0
    %v349 = vsel %vm269, %v341, 0.0
    %v350 = vsel %vm269, %v342, 0.0
    %v351 = vsel %vm269, %v343, 0.0
    %v352 = vsel %vm269, %v344, 0.0
    %vm353 = vcmask 523264
    %v354 = vsel %vm353, %v345, 0.0
    %355 = vadd.xlane.f32.xlu0 %v354
    %v356 = vpop.xlane.xlu0 %355
    %v357 = vsel %vm353, %v346, 0.0
    %358 = vadd.xlane.f32.xlu0 %v357
    %v359 = vpop.xlane.xlu0 %358
    %v360 = vsel %vm353, %v347, 0.0
    %361 = vadd.xlane.f32.xlu0 %v360
    %v362 = vpop.xlane.xlu0 %361
    %v363 = vsel %vm353, %v348, 0.0
    %364 = vadd.xlane.f32.xlu0 %v363
    %v365 = vpop.xlane.xlu0 %364
    %v366 = vsel %vm353, %v349, 0.0
    %367 = vadd.xlane.f32.xlu0 %v366
    %v368 = vpop.xlane.xlu0 %367
    %v369 = vsel %vm353, %v350, 0.0
    %370 = vadd.xlane.f32.xlu0 %v369
    %v371 = vpop.xlane.xlu0 %370
    %v372 = vsel %vm353, %v351, 0.0
    %373 = vadd.xlane.f32.xlu0 %v372
    %v374 = vpop.xlane.xlu0 %373
    %v375 = vsel %vm353, %v352, 0.0
    %376 = vadd.xlane.f32.xlu0 %v375
    %v377 = vpop.xlane.xlu0 %376
    %v378 = vsel %vm353, %v337, 0.0
    %379 = vadd.xlane.f32.xlu0 %v378
    %v380 = vpop.xlane.xlu0 %379
    %v381 = vsel %vm353, %v338, 0.0
    %382 = vadd.xlane.f32.xlu0 %v381
    %v383 = vpop.xlane.xlu0 %382
    %v384 = vsel %vm353, %v339, 0.0
    %385 = vadd.xlane.f32.xlu0 %v384
    %v386 = vpop.xlane.xlu0 %385
    %v387 = vsel %vm353, %v340, 0.0
    %388 = vadd.xlane.f32.xlu0 %v387
    %v389 = vpop.xlane.xlu0 %388
    %v390 = vsel %vm353, %v341, 0.0
    %391 = vadd.xlane.f32.xlu0 %v390
    %v392 = vpop.xlane.xlu0 %391
    %v393 = vsel %vm353, %v342, 0.0
    %394 = vadd.xlane.f32.xlu0 %v393
    %v395 = vpop.xlane.xlu0 %394
    %v396 = vsel %vm353, %v343, 0.0
    %397 = vadd.xlane.f32.xlu0 %v396
    %v398 = vpop.xlane.xlu0 %397
    %v399 = vsel %vm353, %v344, 0.0
    %400 = vadd.xlane.f32.xlu0 %v399
    %v401 = vpop.xlane.xlu0 %400
    %v402 = vsub.f32 %v380, %v356
    %v403 = vsub.f32 %v383, %v359
    %v404 = vsub.f32 %v386, %v362
    %v405 = vsub.f32 %v389, %v365
    %v406 = vsub.f32 %v392, %v368
    %v407 = vsub.f32 %v395, %v371
    %v408 = vsub.f32 %v398, %v374
    %v409 = vsub.f32 %v401, %v377
    %v418 = vperm.slane %v356, %v154
    %v419 = vperm.slane %v359, %v154
    %v420 = vperm.slane %v362, %v154
    %v421 = vperm.slane %v365, %v154
    %v422 = vperm.slane %v368, %v154
    %v423 = vperm.slane %v371, %v154
    %v424 = vperm.slane %v374, %v154
    %v425 = vperm.slane %v377, %v154
    %vm426 = vcmask 1041409
    %v427 = vsel %vm426, %v419, %v418
    %vm428 = vcmask 1042434
    %v429 = vsel %vm428, %v420, %v427
    %vm430 = vcmask 1043459
    %v431 = vsel %vm430, %v421, %v429
    %vm432 = vcmask 1044484
    %v433 = vsel %vm432, %v422, %v431
    %vm434 = vcmask 1045509
    %v435 = vsel %vm434, %v423, %v433
    %vm436 = vcmask 1046534
    %v437 = vsel %vm436, %v424, %v435
    %vm438 = vcmask 1047559
    %v439 = vsel %vm438, %v425, %v437
    %vm441 = vcmask 64512
    %v442 = vsel %vm441, %v439, -inf
    %443 = vmax.xlane.f32.xlu0 %v442
    %v444 = vpop.xlane.xlu0 %443
    %v446 = vperm.slane %v444, 0
    %v447 = vperm.slane %v444, 1
    %v448 = vperm.slane %v444, 2
    %v449 = vperm.slane %v444, 3
    %v450 = vperm.slane %v444, 4
    %v451 = vperm.slane %v444, 5
    %v452 = vperm.slane %v444, 6
    %v453 = vperm.slane %v444, 7
    %v462 = vsub.f32 %v356, %v446
    %v463 = vsub.f32 %v359, %v447
    %v464 = vsub.f32 %v362, %v448
    %v465 = vsub.f32 %v365, %v449
    %v466 = vsub.f32 %v368, %v450
    %v467 = vsub.f32 %v371, %v451
    %v468 = vsub.f32 %v374, %v452
    %v469 = vsub.f32 %v377, %v453
    %v470 = vmul.f32 %v462, 1.442695
    %v471 = vpow.pop %v470
    %v472 = vmul.f32 %v463, 1.442695
    %v473 = vpow.pop %v472
    %v474 = vmul.f32 %v464, 1.442695
    %v475 = vpow.pop %v474
    %v476 = vmul.f32 %v465, 1.442695
    %v477 = vpow.pop %v476
    %v478 = vmul.f32 %v466, 1.442695
    %v479 = vpow.pop %v478
    %v480 = vmul.f32 %v467, 1.442695
    %v481 = vpow.pop %v480
    %v482 = vmul.f32 %v468, 1.442695
    %v483 = vpow.pop %v482
    %v484 = vmul.f32 %v469, 1.442695
    %v485 = vpow.pop %v484
    %494 = vset.pattern.permute.xlu0 0
    %495 = vperm.xlu0 %494, %v471
    %v496 = vpop.permute.xlu0 %495
    %497 = vset.pattern.permute.xlu0 0
    %498 = vperm.xlu0 %497, %v473
    %v499 = vpop.permute.xlu0 %498
    %500 = vset.pattern.permute.xlu0 0
    %501 = vperm.xlu0 %500, %v475
    %v502 = vpop.permute.xlu0 %501
    %503 = vset.pattern.permute.xlu0 0
    %504 = vperm.xlu0 %503, %v477
    %v505 = vpop.permute.xlu0 %504
    %506 = vset.pattern.permute.xlu0 0
    %507 = vperm.xlu0 %506, %v479
    %v508 = vpop.permute.xlu0 %507
    %509 = vset.pattern.permute.xlu0 0
    %510 = vperm.xlu0 %509, %v481
    %v511 = vpop.permute.xlu0 %510
    %512 = vset.pattern.permute.xlu0 0
    %513 = vperm.xlu0 %512, %v483
    %v514 = vpop.permute.xlu0 %513
    %515 = vset.pattern.permute.xlu0 0
    %516 = vperm.xlu0 %515, %v485
    %v517 = vpop.permute.xlu0 %516
    %v518 = vperm.slane %v496, %v154
    %v519 = vperm.slane %v499, %v154
    %v520 = vperm.slane %v502, %v154
    %v521 = vperm.slane %v505, %v154
    %v522 = vperm.slane %v508, %v154
    %v523 = vperm.slane %v511, %v154
    %v524 = vperm.slane %v514, %v154
    %v525 = vperm.slane %v517, %v154
    %v526 = vsel %vm426, %v519, %v518
    %v527 = vsel %vm428, %v520, %v526
    %v528 = vsel %vm430, %v521, %v527
    %v529 = vsel %vm432, %v522, %v528
    %v530 = vsel %vm434, %v523, %v529
    %v531 = vsel %vm436, %v524, %v530
    %v532 = vsel %vm438, %v525, %v531
    %v534 = vsel %vm441, %v532, 0.0
    %535 = vadd.xlane.f32.xlu0 %v534
    %v536 = vpop.xlane.xlu0 %535
    %v537 = vrcp.pop %v536
    %v538 = vmul.f32 %v536, %v537
    %v539 = vsub.f32 2.0, %v538
    %v540 = vmul.f32 %v537, %v539
    %v542 = vperm.slane %v540, 0
    %v543 = vperm.slane %v540, 1
    %v544 = vperm.slane %v540, 2
    %v545 = vperm.slane %v540, 3
    %v546 = vperm.slane %v540, 4
    %v547 = vperm.slane %v540, 5
    %v548 = vperm.slane %v540, 6
    %v549 = vperm.slane %v540, 7
    %v558 = vmul.f32 %v471, %v542
    %v559 = vmul.f32 %v473, %v543
    %v560 = vmul.f32 %v475, %v544
    %v561 = vmul.f32 %v477, %v545
    %v562 = vmul.f32 %v479, %v546
    %v563 = vmul.f32 %v481, %v547
    %v564 = vmul.f32 %v483, %v548
    %v565 = vmul.f32 %v485, %v549
    %v574 = vperm.slane %v402, %v154
    %v575 = vperm.slane %v403, %v154
    %v576 = vperm.slane %v404, %v154
    %v577 = vperm.slane %v405, %v154
    %v578 = vperm.slane %v406, %v154
    %v579 = vperm.slane %v407, %v154
    %v580 = vperm.slane %v408, %v154
    %v581 = vperm.slane %v409, %v154
    %v582 = vsel %vm426, %v575, %v574
    %v583 = vsel %vm428, %v576, %v582
    %v584 = vsel %vm430, %v577, %v583
    %v585 = vsel %vm432, %v578, %v584
    %v586 = vsel %vm434, %v579, %v585
    %v587 = vsel %vm436, %v580, %v586
    %v588 = vsel %vm438, %v581, %v587
    %v590 = vsel %vm441, %v588, -inf
    %591 = vmax.xlane.f32.xlu0 %v590
    %v592 = vpop.xlane.xlu0 %591
    %v594 = vperm.slane %v592, 0
    %v595 = vperm.slane %v592, 1
    %v596 = vperm.slane %v592, 2
    %v597 = vperm.slane %v592, 3
    %v598 = vperm.slane %v592, 4
    %v599 = vperm.slane %v592, 5
    %v600 = vperm.slane %v592, 6
    %v601 = vperm.slane %v592, 7
    %v610 = vsub.f32 %v402, %v594
    %v611 = vsub.f32 %v403, %v595
    %v612 = vsub.f32 %v404, %v596
    %v613 = vsub.f32 %v405, %v597
    %v614 = vsub.f32 %v406, %v598
    %v615 = vsub.f32 %v407, %v599
    %v616 = vsub.f32 %v408, %v600
    %v617 = vsub.f32 %v409, %v601
    %v618 = vmul.f32 %v610, 1.442695
    %v619 = vpow.pop %v618
    %v620 = vmul.f32 %v611, 1.442695
    %v621 = vpow.pop %v620
    %v622 = vmul.f32 %v612, 1.442695
    %v623 = vpow.pop %v622
    %v624 = vmul.f32 %v613, 1.442695
    %v625 = vpow.pop %v624
    %v626 = vmul.f32 %v614, 1.442695
    %v627 = vpow.pop %v626
    %v628 = vmul.f32 %v615, 1.442695
    %v629 = vpow.pop %v628
    %v630 = vmul.f32 %v616, 1.442695
    %v631 = vpow.pop %v630
    %v632 = vmul.f32 %v617, 1.442695
    %v633 = vpow.pop %v632
    %642 = vset.pattern.permute.xlu0 0
    %643 = vperm.xlu0 %642, %v619
    %v644 = vpop.permute.xlu0 %643
    %645 = vset.pattern.permute.xlu0 0
    %646 = vperm.xlu0 %645, %v621
    %v647 = vpop.permute.xlu0 %646
    %648 = vset.pattern.permute.xlu0 0
    %649 = vperm.xlu0 %648, %v623
    %v650 = vpop.permute.xlu0 %649
    %651 = vset.pattern.permute.xlu0 0
    %652 = vperm.xlu0 %651, %v625
    %v653 = vpop.permute.xlu0 %652
    %654 = vset.pattern.permute.xlu0 0
    %655 = vperm.xlu0 %654, %v627
    %v656 = vpop.permute.xlu0 %655
    %657 = vset.pattern.permute.xlu0 0
    %658 = vperm.xlu0 %657, %v629
    %v659 = vpop.permute.xlu0 %658
    %660 = vset.pattern.permute.xlu0 0
    %661 = vperm.xlu0 %660, %v631
    %v662 = vpop.permute.xlu0 %661
    %663 = vset.pattern.permute.xlu0 0
    %664 = vperm.xlu0 %663, %v633
    %v665 = vpop.permute.xlu0 %664
    %v666 = vperm.slane %v644, %v154
    %v667 = vperm.slane %v647, %v154
    %v668 = vperm.slane %v650, %v154
    %v669 = vperm.slane %v653, %v154
    %v670 = vperm.slane %v656, %v154
    %v671 = vperm.slane %v659, %v154
    %v672 = vperm.slane %v662, %v154
    %v673 = vperm.slane %v665, %v154
    %v674 = vsel %vm426, %v667, %v666
    %v675 = vsel %vm428, %v668, %v674
    %v676 = vsel %vm430, %v669, %v675
    %v677 = vsel %vm432, %v670, %v676
    %v678 = vsel %vm434, %v671, %v677
    %v679 = vsel %vm436, %v672, %v678
    %v680 = vsel %vm438, %v673, %v679
    %v682 = vsel %vm441, %v680, 0.0
    %683 = vadd.xlane.f32.xlu0 %v682
    %v684 = vpop.xlane.xlu0 %683
    %v685 = vrcp.pop %v684
    %v686 = vmul.f32 %v684, %v685
    %v687 = vsub.f32 2.0, %v686
    %v688 = vmul.f32 %v685, %v687
    %v690 = vperm.slane %v688, 0
    %v691 = vperm.slane %v688, 1
    %v692 = vperm.slane %v688, 2
    %v693 = vperm.slane %v688, 3
    %v694 = vperm.slane %v688, 4
    %v695 = vperm.slane %v688, 5
    %v696 = vperm.slane %v688, 6
    %v697 = vperm.slane %v688, 7
    %v706 = vmul.f32 %v619, %v690
    %v707 = vmul.f32 %v621, %v691
    %v708 = vmul.f32 %v623, %v692
    %v709 = vmul.f32 %v625, %v693
    %v710 = vmul.f32 %v627, %v694
    %v711 = vmul.f32 %v629, %v695
    %v712 = vmul.f32 %v631, %v696
    %v713 = vmul.f32 %v633, %v697
    %715 = vset.pattern.permute.xlu0 1
    %716 = vperm.xlu0 %715, %v74
    %v717 = vpop.permute.xlu0 %716
    %727 = vset.pattern.permute.xlu0 0
    %728 = vperm.xlu0 %727, %v558
    %v729 = vpop.permute.xlu0 %728
    %730 = vset.pattern.permute.xlu0 0
    %731 = vperm.xlu0 %730, %v559
    %v732 = vpop.permute.xlu0 %731
    %733 = vset.pattern.permute.xlu0 0
    %734 = vperm.xlu0 %733, %v560
    %v735 = vpop.permute.xlu0 %734
    %736 = vset.pattern.permute.xlu0 0
    %737 = vperm.xlu0 %736, %v561
    %v738 = vpop.permute.xlu0 %737
    %739 = vset.pattern.permute.xlu0 0
    %740 = vperm.xlu0 %739, %v562
    %v741 = vpop.permute.xlu0 %740
    %742 = vset.pattern.permute.xlu0 0
    %743 = vperm.xlu0 %742, %v563
    %v744 = vpop.permute.xlu0 %743
    %745 = vset.pattern.permute.xlu0 0
    %746 = vperm.xlu0 %745, %v564
    %v747 = vpop.permute.xlu0 %746
    %748 = vset.pattern.permute.xlu0 0
    %749 = vperm.xlu0 %748, %v565
    %v750 = vpop.permute.xlu0 %749
    %v751 = vperm.slane %v729, %v154
    %v752 = vperm.slane %v732, %v154
    %v753 = vperm.slane %v735, %v154
    %v754 = vperm.slane %v738, %v154
    %v755 = vperm.slane %v741, %v154
    %v756 = vperm.slane %v744, %v154
    %v757 = vperm.slane %v747, %v154
    %v758 = vperm.slane %v750, %v154
    %v759 = vsel %vm426, %v752, %v751
    %v760 = vsel %vm428, %v753, %v759
    %v761 = vsel %vm430, %v754, %v760
    %v762 = vsel %vm432, %v755, %v761
    %v763 = vsel %vm434, %v756, %v762
    %v764 = vsel %vm436, %v757, %v763
    %v765 = vsel %vm438, %v758, %v764
    %v767 = vmul.f32 %v717, %v765
    %768 = vset.pattern.permute.xlu0 2
    %769 = vperm.xlu0 %768, %v74
    %v770 = vpop.permute.xlu0 %769
    %780 = vset.pattern.permute.xlu0 0
    %781 = vperm.xlu0 %780, %v706
    %v782 = vpop.permute.xlu0 %781
    %783 = vset.pattern.permute.xlu0 0
    %784 = vperm.xlu0 %783, %v707
    %v785 = vpop.permute.xlu0 %784
    %786 = vset.pattern.permute.xlu0 0
    %787 = vperm.xlu0 %786, %v708
    %v788 = vpop.permute.xlu0 %787
    %789 = vset.pattern.permute.xlu0 0
    %790 = vperm.xlu0 %789, %v709
    %v791 = vpop.permute.xlu0 %790
    %792 = vset.pattern.permute.xlu0 0
    %793 = vperm.xlu0 %792, %v710
    %v794 = vpop.permute.xlu0 %793
    %795 = vset.pattern.permute.xlu0 0
    %796 = vperm.xlu0 %795, %v711
    %v797 = vpop.permute.xlu0 %796
    %798 = vset.pattern.permute.xlu0 0
    %799 = vperm.xlu0 %798, %v712
    %v800 = vpop.permute.xlu0 %799
    %801 = vset.pattern.permute.xlu0 0
    %802 = vperm.xlu0 %801, %v713
    %v803 = vpop.permute.xlu0 %802
    %v804 = vperm.slane %v782, %v154
    %v805 = vperm.slane %v785, %v154
    %v806 = vperm.slane %v788, %v154
    %v807 = vperm.slane %v791, %v154
    %v808 = vperm.slane %v794, %v154
    %v809 = vperm.slane %v797, %v154
    %v810 = vperm.slane %v800, %v154
    %v811 = vperm.slane %v803, %v154
    %v812 = vsel %vm426, %v805, %v804
    %v813 = vsel %vm428, %v806, %v812
    %v814 = vsel %vm430, %v807, %v813
    %v815 = vsel %vm432, %v808, %v814
    %v816 = vsel %vm434, %v809, %v815
    %v817 = vsel %vm436, %v810, %v816
    %v818 = vsel %vm438, %v811, %v817
    %v820 = vmul.f32 %v770, %v818
    %v821 = vadd.f32 %v767, %v820
    %822 = vst.msk [vmem:[#allocation8] sm:$0xff] %vm441, %v821
    %v823 = vadd.f32 %v71, %v767
    %v824 = vmax.f32 %v823, 0.0
    %v825 = vmin.f32 %v824, 1.0
    %s826 = scalar_lea.vmem [#allocation8], 8
    %827 = vst.msk [vmem:[%s826] sm:$0xff] %vm441, %v825
    // Predicated region
    $region38: #{tpu_custom_call.1} parent=1 // pred_check
      _
    $region39: #{tpu_custom_call.1} parent=1 // pred_check_branch
      %829 = sbr.rel (0) target = $region41
    $region40: #{tpu_custom_call.1} parent=1 // pred_region
      %831 = vsyncadd [#allocation4], 0
      %s832 = sshll.u32 [#allocation8], 4
      %s833 = int_to_ptr.vmem [resolvable:$true] %s832
      %s834 = sshll.u32 %s6, 4
      %s835 = int_to_ptr.hbm [resolvable:$true] %s834
      %840 = dma.vmem_to_hbm [thread:$0]  %s833, 256, %s835, [#allocation4], 128, 128, 8
    $region41: #{tpu_custom_call.1} parent=1 // pred_fallthru
      _
    // Predicated region
    $region42: #{tpu_custom_call.1} parent=1 // pred_check
      _
    $region43: #{tpu_custom_call.1} parent=1 // pred_check_branch
      %842 = sbr.rel (0) target = $region45
    $region44: #{tpu_custom_call.1} parent=1 // pred_region
      %844 = dma.done [#allocation4], 256
    $region45: #{tpu_custom_call.1} parent=1 // pred_fallthru
      _
    %845 = vsyncpa [#allocation3], 1
    %846 = vsyncpa [#allocation6], 1
    %847 = vsyncpa [#allocation4], 1

</llo_original>
